<compile_context>
chip_gen: v5e
topology: v5e:2x2
jax: 0.10.0
libtpu: 0.0.40
codegen_flags: <defaults>
</compile_context>

<pallas_src>
import jax
import jax.numpy as jnp
from jax.experimental import pallas as pl
from jax.experimental.pallas import tpu as pltpu

LANES = 128
_FAST_PATH_MAX_ELEMS = 64 * 1024   # below this, fused XLA beats a kernel launch


def _round_up(x, m):
    return ((x + m - 1) // m) * m


def _make_masked_sum_kernel(n_terms, C, tile_rows):
    """Kernel over grid (B, n_tiles); terms are (B, rows, 128) lane-dense."""

    def kernel(lengths_ref, *refs):
        term_refs = refs[:n_terms]
        out_ref = refs[n_terms]          # (1, n_terms, 128) block
        acc_ref = refs[n_terms + 1]      # (n_terms, tile_rows, 128) VMEM scratch

        b = pl.program_id(0)
        t = pl.program_id(1)
        n_tiles = pl.num_programs(1)

        @pl.when(t == 0)
        def _():
            acc_ref[...] = jnp.zeros_like(acc_ref)

        length = lengths_ref[b]          # scalar from SMEM (prefetched)
        valid_elems = length * C         # element `flat` is valid iff flat < this
        row0 = t * tile_rows

        # Skip tiles whose first element already lies in the padded region.
        @pl.when(row0 * LANES < valid_elems)
        def _():
            row = jax.lax.broadcasted_iota(jnp.int32, (tile_rows, LANES), 0)
            lane = jax.lax.broadcasted_iota(jnp.int32, (tile_rows, LANES), 1)
            flat = (row0 + row) * LANES + lane      # index in flattened T*C axis
            valid = flat < valid_elems              # True = keep (pad: t >= len)
            for j in range(n_terms):                # fused terms share the mask
                x = term_refs[j][0].astype(jnp.float32)      # (tile_rows, 128)
                acc_ref[j] += jnp.where(valid, x, 0.0)       # pure VPU add

        @pl.when(t == n_tiles - 1)
        def _():
            # One sublane-reduce per batch; output stays lane-dense (J, 128).
            out_ref[0] = jnp.sum(acc_ref[...], axis=1)

    return kernel


def masked_sum_terms(terms, lengths, *, max_tile_rows=1024, force_pallas=False):
    """Per-term sums over (B, T, C) with frames t >= lengths[b] zeroed.

    Returns a float32 array of shape (len(terms),).
    """
    terms = list(terms)
    B, T, C = terms[0].shape
    n_terms = len(terms)

    if not force_pallas and B * T * C < _FAST_PATH_MAX_ELEMS:
        # Small-tensor fast path: a fused XLA reduction beats kernel overhead.
        pad = jnp.arange(T, dtype=jnp.int32)[None, :] >= lengths[:, None]
        return jnp.stack([
            jnp.sum(jnp.where(pad[:, :, None], 0.0, tm.astype(jnp.float32)))
            for tm in terms])

    n = T * C
    rows = pl.cdiv(n, LANES)
    tile_rows = min(max_tile_rows, _round_up(rows, 8))   # (8,128)-aligned tiles
    n_tiles = pl.cdiv(rows, tile_rows)
    rows_padded = n_tiles * tile_rows
    n_padded = rows_padded * LANES

    def _prep(x):
        flat = x.reshape(B, n)
        if n_padded != n:
            # TODO(synk): for awkward T*C this zero-pad copies the term once in
            # HBM; a ragged last tile (pl.BoundedSlice / manual DMA) would avoid it.
            flat = jnp.pad(flat, ((0, 0), (0, n_padded - n)))
        return flat.reshape(B, rows_padded, LANES)

    prepped = [_prep(tm) for tm in terms]          # dtype preserved (bf16 stays bf16)
    lengths = lengths.astype(jnp.int32)

    term_spec = pl.BlockSpec((1, tile_rows, LANES), lambda b, t, lens: (b, t, 0))
    out = pl.pallas_call(
        _make_masked_sum_kernel(n_terms, C, tile_rows),
        out_shape=jax.ShapeDtypeStruct((B, n_terms, LANES), jnp.float32),
        grid_spec=pltpu.PrefetchScalarGridSpec(
            num_scalar_prefetch=1,                 # lengths -> SMEM
            grid=(B, n_tiles),
            in_specs=[term_spec] * n_terms,
            out_specs=pl.BlockSpec((1, n_terms, LANES),
                                   lambda b, t, lens: (b, 0, 0)),
            scratch_shapes=[pltpu.VMEM((n_terms, tile_rows, LANES), jnp.float32)],
        ),
        compiler_params=pltpu.CompilerParams(
            dimension_semantics=("parallel", "arbitrary"),  # batch across TCs
            vmem_limit_bytes=32 * 1024 * 1024),
    )(lengths, *prepped)

    # Final scalar reduce of the lane-dense per-batch partials.
    return out.sum(axis=(0, 2))


def quantizer_loss(outputs, lambda_vq=1.0, lambda_pr=1.0, force_pallas=False):
    """JAX/Pallas equivalent of QuantizerLoss.forward."""
    # TODO(synk): the PyTorch module masked_fill_'s the input terms in place;
    # JAX arrays are immutable so only the returned loss dict is replicated.
    loss = {'vq_loss': jnp.float32(0.0)}

    latent_losses = outputs['encoder_diffs']
    if not isinstance(latent_losses, (tuple, list)):
        latent_losses = [latent_losses]

    for i, latent_loss in enumerate(latent_losses):
        latent_length = outputs['encoder_lengths'][i]
        if not isinstance(latent_loss, (tuple, list)):
            latent_loss = [latent_loss]
        total_len = jnp.sum(latent_length).astype(jnp.float32)

        # Terms that share a mask (same shape) are fused into one pallas_call.
        if len({tm.shape for tm in latent_loss}) == 1:
            sums = masked_sum_terms(latent_loss, latent_length,
                                    force_pallas=force_pallas)
        else:
            sums = jnp.stack([
                masked_sum_terms([tm], latent_length, force_pallas=force_pallas)[0]
                for tm in latent_loss])

        for j, term in enumerate(latent_loss):
            t = sums[j] / total_len / jnp.float32(term.shape[2])
            loss['latent_loss_{}_{}'.format(i, j)] = t
            loss['vq_loss'] = loss['vq_loss'] + lambda_vq * t

    if 'decoder_diffs' in outputs:
        dd = outputs['decoder_diffs']
        if isinstance(dd, dict):
            dd = dict(dd)                          # don't mutate caller's dict
            latent_loss = lambda_pr * dd.pop('total_loss')
            loss['vq_loss'] = loss['vq_loss'] + latent_loss
            loss.update(dd)

    return loss


def _reference_loss(outputs, lambda_vq=1.0, lambda_pr=1.0):
    """Pure-JAX reference for validation."""
    loss = {'vq_loss': jnp.float32(0.0)}
    for i, latent_loss in enumerate(outputs['encoder_diffs']):
        lengths = outputs['encoder_lengths'][i]
        B, T, C = latent_loss[0].shape
        pad_mask = jnp.arange(T)[None, :] >= lengths[:, None]      # True = pad
        for j, term in enumerate(latent_loss):
            masked = jnp.where(pad_mask[:, :, None], 0.0, term.astype(jnp.float32))
            t = jnp.sum(masked) / jnp.sum(lengths) / C
            loss['latent_loss_{}_{}'.format(i, j)] = t
            loss['vq_loss'] = loss['vq_loss'] + lambda_vq * t
    dd = dict(outputs['decoder_diffs'])
    loss['vq_loss'] = loss['vq_loss'] + lambda_pr * dd.pop('total_loss')
    loss.update(dd)
    return loss


if __name__ == "__main__":
    key = jax.random.PRNGKey(0)
    k1, k2 = jax.random.split(key, 2)

    B, T, C = 2, 16, 32
    # encoder_diffs: one quantizer level, two loss terms (codebook + commit)
    term0 = jax.random.normal(k1, (B, T, C), dtype=jnp.float32) ** 2
    term1 = jax.random.normal(k2, (B, T, C), dtype=jnp.float32) ** 2
    lengths = jnp.array([16, 12], dtype=jnp.int32)

    outputs = {
        'encoder_diffs': [[term0, term1]],
        'encoder_lengths': [lengths],
        'decoder_diffs': {
            'total_loss': jnp.float32(0.25),
            'pred_loss_0': jnp.float32(0.1),
        },
    }

    # force_pallas=True so the demo-sized inputs exercise the kernel path
    # (production-sized inputs take it automatically via the size threshold).
    loss = quantizer_loss(outputs, lambda_vq=1.0, lambda_pr=1.0, force_pallas=True)
    loss = jax.tree_util.tree_map(jax.block_until_ready, loss)

    ref = _reference_loss(outputs, lambda_vq=1.0, lambda_pr=1.0)
    for k in ref:
        assert jnp.allclose(loss[k], ref[k], rtol=1e-5, atol=1e-5), (
            k, loss[k], ref[k])

    print("KERNEL_OK")
</pallas_src>

<mosaic_0001>
module attributes {stable_mosaic.version = 11 : i64} {
  func.func @kernel(%arg0: i32, %arg1: i32, %arg2: memref<2xi32, #tpu.memory_space<smem>>, %arg3: memref<1x8x128xf32, #tpu.memory_space<vmem>>, %arg4: memref<1x8x128xf32, #tpu.memory_space<vmem>>, %arg5: memref<1x2x128xf32, #tpu.memory_space<vmem>>, %arg6: memref<2x8x128xf32, #tpu.memory_space<vmem>>) attributes {dimension_semantics = [#tpu.dimension_semantics<parallel>, #tpu.dimension_semantics<arbitrary>], iteration_bounds = array<i64: 2, 1>, scalar_prefetch = 1 : i64, scratch_operands = 1 : i64, tpu.core_type = #tpu.core_type<tc>, window_params = [{transform_indices = @transform_0, window_bounds = array<i64: 1, 8, 128>}, {transform_indices = @transform_1, window_bounds = array<i64: 1, 8, 128>}, {transform_indices = @transform_2, window_bounds = array<i64: 1, 2, 128>}]} {
    %c0_i32 = arith.constant 0 : i32
    %0 = arith.cmpi eq, %arg1, %c0_i32 : i32
    %1 = arith.extui %0 : i1 to i32
    %c0_i32_0 = arith.constant 0 : i32
    %2 = arith.cmpi ne, %1, %c0_i32_0 : i32
    scf.if %2 {
      %cst = arith.constant 0.000000e+00 : f32
      %14 = vector.broadcast %cst : f32 to vector<2x8x128xf32>
      %c0 = arith.constant 0 : index
      %c0_4 = arith.constant 0 : index
      %c0_5 = arith.constant 0 : index
      %15 = vector.load %arg6[%c0, %c0_4, %c0_5] : memref<2x8x128xf32, #tpu.memory_space<vmem>>, vector<2x8x128xf32>
      tpu.vector_store %arg6[%c0, %c0_4, %c0_5], %14 {strides = array<i32>} : memref<2x8x128xf32, #tpu.memory_space<vmem>>, vector<2x8x128xf32>,
    } else {
    }
    %3 = arith.index_cast %arg0 : i32 to index
    %4 = memref.load %arg2[%3] : memref<2xi32, #tpu.memory_space<smem>>
    %c32_i32 = arith.constant 32 : i32
    %5 = arith.muli %4, %c32_i32 : i32
    %c8_i32 = arith.constant 8 : i32
    %6 = arith.muli %arg1, %c8_i32 : i32
    %c128_i32 = arith.constant 128 : i32
    %7 = arith.muli %6, %c128_i32 : i32
    %8 = arith.cmpi slt, %7, %5 : i32
    %9 = arith.extui %8 : i1 to i32
    %c0_i32_1 = arith.constant 0 : i32
    %10 = arith.cmpi ne, %9, %c0_i32_1 : i32
    scf.if %10 {
      %14 = tpu.iota {dimensions = array<i32: 0>} : vector<8x128xi32>
      %15 = tpu.iota {dimensions = array<i32: 1>} : vector<8x128xi32>
      %16 = vector.broadcast %6 : i32 to vector<8x128xi32>
      %17 = arith.addi %16, %14 : vector<8x128xi32>
      %c128_i32_4 = arith.constant 128 : i32
      %18 = vector.broadcast %c128_i32_4 : i32 to vector<8x128xi32>
      %19 = arith.muli %17, %18 : vector<8x128xi32>
      %20 = arith.addi %19, %15 : vector<8x128xi32>
      %21 = vector.broadcast %5 : i32 to vector<8x128xi32>
      %22 = arith.cmpi slt, %20, %21 : vector<8x128xi32>
      %c0 = arith.constant 0 : index
      %c0_5 = arith.constant 0 : index
      %c0_6 = arith.constant 0 : index
      %23 = vector.load %arg3[%c0, %c0_5, %c0_6] : memref<1x8x128xf32, #tpu.memory_space<vmem>>, vector<1x8x128xf32>
      %24 = vector.shape_cast %23 : vector<1x8x128xf32> to vector<8x128xf32>
      %c0_7 = arith.constant 0 : index
      %c0_8 = arith.constant 0 : index
      %c0_9 = arith.constant 0 : index
      %25 = vector.load %arg6[%c0_7, %c0_8, %c0_9] : memref<2x8x128xf32, #tpu.memory_space<vmem>>, vector<1x8x128xf32>
      %26 = vector.shape_cast %25 : vector<1x8x128xf32> to vector<8x128xf32>
      %cst = arith.constant 0.000000e+00 : f32
      %27 = vector.broadcast %cst : f32 to vector<8x128xf32>
      %28 = arith.select %22, %24, %27 : vector<8x128xi1>, vector<8x128xf32>
      %29 = arith.addf %26, %28 : vector<8x128xf32>
      %c0_10 = arith.constant 0 : index
      %c0_11 = arith.constant 0 : index
      %c0_12 = arith.constant 0 : index
      %30 = vector.load %arg6[%c0_10, %c0_11, %c0_12] : memref<2x8x128xf32, #tpu.memory_space<vmem>>, vector<1x8x128xf32>
      %31 = vector.shape_cast %30 : vector<1x8x128xf32> to vector<8x128xf32>
      %32 = vector.shape_cast %29 : vector<8x128xf32> to vector<1x8x128xf32>
      tpu.vector_store %arg6[%c0_10, %c0_11, %c0_12], %32 {strides = array<i32>} : memref<2x8x128xf32, #tpu.memory_space<vmem>>, vector<1x8x128xf32>,
      %c0_13 = arith.constant 0 : index
      %c0_14 = arith.constant 0 : index
      %c0_15 = arith.constant 0 : index
      %33 = vector.load %arg4[%c0_13, %c0_14, %c0_15] : memref<1x8x128xf32, #tpu.memory_space<vmem>>, vector<1x8x128xf32>
      %34 = vector.shape_cast %33 : vector<1x8x128xf32> to vector<8x128xf32>
      %c1 = arith.constant 1 : index
      %c0_16 = arith.constant 0 : index
      %c0_17 = arith.constant 0 : index
      %35 = vector.load %arg6[%c1, %c0_16, %c0_17] : memref<2x8x128xf32, #tpu.memory_space<vmem>>, vector<1x8x128xf32>
      %36 = vector.shape_cast %35 : vector<1x8x128xf32> to vector<8x128xf32>
      %cst_18 = arith.constant 0.000000e+00 : f32
      %37 = vector.broadcast %cst_18 : f32 to vector<8x128xf32>
      %38 = arith.select %22, %34, %37 : vector<8x128xi1>, vector<8x128xf32>
      %39 = arith.addf %36, %38 : vector<8x128xf32>
      %c1_19 = arith.constant 1 : index
      %c0_20 = arith.constant 0 : index
      %c0_21 = arith.constant 0 : index
      %40 = vector.load %arg6[%c1_19, %c0_20, %c0_21] : memref<2x8x128xf32, #tpu.memory_space<vmem>>, vector<1x8x128xf32>
      %41 = vector.shape_cast %40 : vector<1x8x128xf32> to vector<8x128xf32>
      %42 = vector.shape_cast %39 : vector<8x128xf32> to vector<1x8x128xf32>
      tpu.vector_store %arg6[%c1_19, %c0_20, %c0_21], %42 {strides = array<i32>} : memref<2x8x128xf32, #tpu.memory_space<vmem>>, vector<1x8x128xf32>,
    } else {
    }
    %c0_i32_2 = arith.constant 0 : i32
    %11 = arith.cmpi eq, %arg1, %c0_i32_2 : i32
    %12 = arith.extui %11 : i1 to i32
    %c0_i32_3 = arith.constant 0 : i32
    %13 = arith.cmpi ne, %12, %c0_i32_3 : i32
    scf.if %13 {
      %c0 = arith.constant 0 : index
      %c0_4 = arith.constant 0 : index
      %c0_5 = arith.constant 0 : index
      %14 = vector.load %arg6[%c0, %c0_4, %c0_5] : memref<2x8x128xf32, #tpu.memory_space<vmem>>, vector<2x8x128xf32>
      %cst = arith.constant dense<0.000000e+00> : vector<2x128xf32>
      %15 = vector.multi_reduction <add>, %14, %cst [1] : vector<2x8x128xf32> to vector<2x128xf32>
      %c0_6 = arith.constant 0 : index
      %c0_7 = arith.constant 0 : index
      %c0_8 = arith.constant 0 : index
      %16 = vector.load %arg5[%c0_6, %c0_7, %c0_8] : memref<1x2x128xf32, #tpu.memory_space<vmem>>, vector<1x2x128xf32>
      %17 = vector.shape_cast %16 : vector<1x2x128xf32> to vector<2x128xf32>
      %18 = vector.shape_cast %15 : vector<2x128xf32> to vector<1x2x128xf32>
      tpu.vector_store %arg5[%c0_6, %c0_7, %c0_8], %18 {strides = array<i32>} : memref<1x2x128xf32, #tpu.memory_space<vmem>>, vector<1x2x128xf32>,
    } else {
    }
    return
  }
  func.func @transform_0(%arg0: i32, %arg1: i32, %arg2: memref<2xi32, #tpu.memory_space<smem>>) -> (i32, i32, i32) {
    %c0_i32 = arith.constant 0 : i32
    %c0_i32_0 = arith.constant 0 : i32
    return %arg0, %arg1, %c0_i32 : i32, i32, i32
  }
  func.func @transform_1(%arg0: i32, %arg1: i32, %arg2: memref<2xi32, #tpu.memory_space<smem>>) -> (i32, i32, i32) {
    %c0_i32 = arith.constant 0 : i32
    %c0_i32_0 = arith.constant 0 : i32
    return %arg0, %arg1, %c0_i32 : i32, i32, i32
  }
  func.func @transform_2(%arg0: i32, %arg1: i32, %arg2: memref<2xi32, #tpu.memory_space<smem>>) -> (i32, i32, i32) {
    %c0_i32 = arith.constant 0 : i32
    %c0_i32_0 = arith.constant 0 : i32
    %c0_i32_1 = arith.constant 0 : i32
    return %arg0, %c0_i32, %c0_i32_0 : i32, i32, i32
  }
}

</mosaic_0001>

<llo_original>
// kernel: tpu_custom_call.1
$region0: #{tpu_custom_call.1}
  #allocation0 [shape = 'u32[]', space=smem, size = 0x4, offset = 0x4, fixed_abs, tag = 'smem constant byte address 0x4 - core index']
  #allocation1 [shape = 'u32[72,128]{1,0:T(1,128)}', space=vmem, size = 0x9000, scoped, tag = 'internal scratch']
  #allocation2 [shape = 'f32[2,8,128]{2,1,0:T(8,128)}', space=vmem, size = 0x2000, scoped, tag = 'scratch operand']
  #allocation3 [shape = 's32[1]{0}', space=sflag, size = 0x4, scoped, tag = 'scoped memory for tpu_custom_call.1']
  #allocation4 [shape = 'u8[512]{0}', space=smem, size = 0x200, scoped, tag = 'prefetched SMEM operand 0']
  %s0 = inlined_call_operand.hbm [shape: s32[2], index: 0, kind: input, shape index: {}]
  %s1 = inlined_call_operand.hbm [shape: f32[2,8,128], index: 1, kind: input, shape index: {}]
  %s2 = inlined_call_operand.hbm [shape: f32[2,8,128], index: 2, kind: input, shape index: {}]
  %s3 = inlined_call_operand.hbm [shape: f32[2,2,128], index: 3, kind: output, shape index: {}]
  %s4 = sld [smem:[#allocation0]]
  $region61: #{tpu_custom_call.1} parent=0
    _
  %s6 = ssub.s32 1, %s4
  %s7 = scalar_select 0, %s6, %s4
  %s9 = sshll.u32 %s0, 4
  %s10 = int_to_ptr.hbm [resolvable:$true] %s9
  %12 = dma.hbm_to_smem %s10, 16, [#allocation4], [#allocation3]
  %14 = dma.done [#allocation3], 16
  %15 = sfence
  $region1: #{tpu_custom_call.1} parent=0
    #allocation5 [shape = 'u8[8192]{0}', space=vmem, size = 0x2000, scoped, tag = 'input window, operand 1']
    #allocation6 [shape = 's32[2]{0}', space=sflag, size = 0x8, scoped, tag = 'scoped memory for tpu_custom_call.1']
    #allocation7 [shape = 's32[2]{0}', space=sflag, size = 0x8, scoped, tag = 'scoped memory for tpu_custom_call.1']
    #allocation8 [shape = 'u8[8192]{0}', space=vmem, size = 0x2000, scoped, tag = 'input window, operand 2']
    #allocation9 [shape = 's32[2]{0}', space=sflag, size = 0x8, scoped, tag = 'scoped memory for tpu_custom_call.1']
    #allocation10 [shape = 'u8[2048]{0}', space=vmem, size = 0x800, scoped, tag = 'output window, operand 0']
    %16 = vsyncpa [#allocation6], 0
    %s17 = scalar_lea.sflag [#allocation6], 1
    %18 = vsyncpa %s17, 0
    %19 = vsyncpa [#allocation9], 0
    %s20 = scalar_lea.sflag [#allocation9], 1
    %21 = vsyncpa %s20, 0
    %22 = vsyncpa [#allocation7], 0
    %s23 = scalar_lea.sflag [#allocation7], 1
    %24 = vsyncpa %s23, 0
    loop: start=0, step=1, limit=4
    $region2: #{tpu_custom_call.1} parent=1 // loop_pre_header
      _
    $region3: #{tpu_custom_call.1} parent=1 // loop_header
      %s26 = sphi 0, %s30
      %p27 = scmp.ge.s32.totalorder %s26, 4
      %s33 = sphi 0, %s45
      %s34 = sphi 0, %s41
      %s35 = sphi 0, %s33
      %s36 = sphi 0, %s34
      %s37 = sphi 0, %s35
      %s38 = sphi 0, %s36
      %s50 = sphi 0, %s52
      %s53 = sphi 0, %s50
      %s54 = sphi 0, %s53
      %s70 = sphi 0, %s54
      %s78 = sphi 0, %s80
      %s81 = sphi 0, %s78
      %s82 = sphi 0, %s81
      %s98 = sphi 0, %s82
      %s104 = sphi 0, %s106
      %s107 = sphi 0, %s104
      %s108 = sphi 0, %s107
      %s124 = sphi 0, %s108
    $region4: #{tpu_custom_call.1} parent=1 // loop_header_branch
      %29 = sbr.rel (%p27) target = $region8
    $region5: #{tpu_custom_call.1} parent=1 // loop_body
      %s31 = ssub.s32 %s26, 1
      %s32 = ssub.s32 %s26, 2
      %s39 = sadd.s32 1, %s34
      %p40 = scmp.ge.s32.totalorder %s39, 1
      %s41 = scalar_select %p40, 0, %s39
      %s42 = sadd.s32 1, %s33
      %s43 = scalar_select %p40, %s42, %s33
      %p44 = scmp.ge.s32.totalorder %s43, 2
      %s45 = scalar_select %p44, 0, %s43
      %s46 = ssub.s32 %s33, %s45
      %s47 = ssub.s32 %s34, %s41
      %s48 = sor.u32 %s46, %s47
      %p49 = scmp.eq.s32.totalorder %s48, 0
      %s51 = sadd.s32 %s50, 1
      %s52 = scalar_select %p49, %s50, %s51
      %p55 = pneg %p49
      %p56 = scmp.eq.s32.totalorder %s26, 1
      %p57 = por %p55, %p56
      %p58 = scmp.ne.s32.totalorder %s50, %s53
      %p59 = scmp.eq.s32.totalorder %s26, 0
      %p60 = por %p58, %p59
      %p61 = scmp.ne.s32.totalorder %s50, %s53
      %p62 = scmp.eq.s32.totalorder %s31, 1
      %p63 = por %p61, %p62
      %p64 = scmp.ne.s32.totalorder %s53, %s54
      %p65 = scmp.eq.s32.totalorder %s31, 0
      %p66 = por %p64, %p65
      %p67 = scmp.ne.s32.totalorder %s53, %s54
      %p68 = scmp.eq.s32.totalorder %s32, 1
      %p69 = por %p67, %p68
      %p71 = scmp.ne.s32.totalorder %s54, %s70
      %p72 = scmp.eq.s32.totalorder %s32, 0
      %p73 = por %p71, %p72
      %s74 = ssub.s32 %s33, %s45
      %s75 = ssub.s32 %s34, %s41
      %s76 = sor.u32 %s74, %s75
      %p77 = scmp.eq.s32.totalorder %s76, 0
      %s79 = sadd.s32 %s78, 1
      %s80 = scalar_select %p77, %s78, %s79
      %p83 = pneg %p77
      %p84 = scmp.eq.s32.totalorder %s26, 1
      %p85 = por %p83, %p84
      %p86 = scmp.ne.s32.totalorder %s78, %s81
      %p87 = scmp.eq.s32.totalorder %s26, 0
      %p88 = por %p86, %p87
      %p89 = scmp.ne.s32.totalorder %s78, %s81
      %p90 = scmp.eq.s32.totalorder %s31, 1
      %p91 = por %p89, %p90
      %p92 = scmp.ne.s32.totalorder %s81, %s82
      %p93 = scmp.eq.s32.totalorder %s31, 0
      %p94 = por %p92, %p93
      %p95 = scmp.ne.s32.totalorder %s81, %s82
      %p96 = scmp.eq.s32.totalorder %s32, 1
      %p97 = por %p95, %p96
      %p99 = scmp.ne.s32.totalorder %s82, %s98
      %p100 = scmp.eq.s32.totalorder %s32, 0
      %p101 = por %p99, %p100
      %s102 = ssub.s32 %s33, %s45
      %p103 = scmp.eq.s32.totalorder %s102, 0
      %s105 = sadd.s32 %s104, 1
      %s106 = scalar_select %p103, %s104, %s105
      %p109 = pneg %p103
      %p110 = scmp.eq.s32.totalorder %s26, 1
      %p111 = por %p109, %p110
      %p112 = scmp.ne.s32.totalorder %s104, %s107
      %p113 = scmp.eq.s32.totalorder %s26, 0
      %p114 = por %p112, %p113
      %p115 = scmp.ne.s32.totalorder %s104, %s107
      %p116 = scmp.eq.s32.totalorder %s31, 1
      %p117 = por %p115, %p116
      %p118 = scmp.ne.s32.totalorder %s107, %s108
      %p119 = scmp.eq.s32.totalorder %s31, 0
      %p120 = por %p118, %p119
      %p121 = scmp.ne.s32.totalorder %s107, %s108
      %p122 = scmp.eq.s32.totalorder %s32, 1
      %p123 = por %p121, %p122
      %p125 = scmp.ne.s32.totalorder %s108, %s124
      %p126 = scmp.eq.s32.totalorder %s32, 0
      %p127 = por %p125, %p126
      %p128 = scmp.le.s32.totalorder 1, %s26
      %p129 = scmp.lt.s32.totalorder %s26, 3
      %p130 = pnand %p128, %p129
      %p131 = pneg %p130
      // Predicated region
      $region9: #{tpu_custom_call.1} parent=5 // pred_check
        _
      $region10: #{tpu_custom_call.1} parent=5 // pred_check_branch
        %133 = sbr.rel (%p130) target = $region12
      $region11: #{tpu_custom_call.1} parent=5 // pred_region
        %s134 = ssub.s32 %s26, 1
      $region12: #{tpu_custom_call.1} parent=5 // pred_fallthru
        _
      %p135 = scmp.lt.s32.totalorder %s26, 2
      // Predicated region
      $region13: #{tpu_custom_call.1} parent=5 // pred_check
        %p136 = pneg %p135
      $region14: #{tpu_custom_call.1} parent=5 // pred_check_branch
        %138 = sbr.rel (%p136) target = $region16
      $region15: #{tpu_custom_call.1} parent=5 // pred_region
        // Predicated region
        $region17: #{tpu_custom_call.1} parent=15 // pred_check
          %p139 = pneg %p60
        $region18: #{tpu_custom_call.1} parent=15 // pred_check_branch
          %141 = sbr.rel (%p139) target = $region20
        $region19: #{tpu_custom_call.1} parent=15 // pred_region
          %s142 = sand.u32 %s50, 1
          %s143 = scalar_lea.sflag [#allocation6], %s142
          %s144 = sand.u32 %s50, 1
          %s145 = smul.addr %s144, 8
          %s146 = scalar_lea.vmem [#allocation5], %s145
          %148 = vsyncadd %s143, 0
          %s149 = sadd.s32 %s34, %s33
          %s150 = smul.addr %s149, 8
          %s151 = scalar_lea.hbm %s1, %s150
          %s153 = sshll.u32 %s151, 4
          %s154 = int_to_ptr.hbm [resolvable:$true] %s153
          %s155 = sshll.u32 %s146, 4
          %s156 = int_to_ptr.vmem [resolvable:$true] %s155
          %158 = dma.hbm_to_vmem [thread:$0]  %s154, 128, %s156, %s143
        $region20: #{tpu_custom_call.1} parent=15 // pred_fallthru
          _
        // Predicated region
        $region21: #{tpu_custom_call.1} parent=15 // pred_check
          %p159 = pneg %p88
        $region22: #{tpu_custom_call.1} parent=15 // pred_check_branch
          %161 = sbr.rel (%p159) target = $region24
        $region23: #{tpu_custom_call.1} parent=15 // pred_region
          %s162 = sand.u32 %s78, 1
          %s163 = scalar_lea.sflag [#allocation9], %s162
          %s164 = sand.u32 %s78, 1
          %s165 = smul.addr %s164, 8
          %s166 = scalar_lea.vmem [#allocation8], %s165
          %168 = vsyncadd %s163, 0
          %s169 = sadd.s32 %s34, %s33
          %s170 = smul.addr %s169, 8
          %s171 = scalar_lea.hbm %s2, %s170
          %s173 = sshll.u32 %s171, 4
          %s174 = int_to_ptr.hbm [resolvable:$true] %s173
          %s175 = sshll.u32 %s166, 4
          %s176 = int_to_ptr.vmem [resolvable:$true] %s175
          %178 = dma.hbm_to_vmem [thread:$0]  %s174, 128, %s176, %s163
        $region24: #{tpu_custom_call.1} parent=15 // pred_fallthru
          _
      $region16: #{tpu_custom_call.1} parent=5 // pred_fallthru
        _
      %p179 = scmp.le.s32.totalorder 1, %s26
      %p180 = scmp.lt.s32.totalorder %s26, 3
      %p181 = pnand %p179, %p180
      %p182 = pneg %p181
      // Predicated region
      $region25: #{tpu_custom_call.1} parent=5 // pred_check
        _
      $region26: #{tpu_custom_call.1} parent=5 // pred_check_branch
        %184 = sbr.rel (%p181) target = $region28
      $region27: #{tpu_custom_call.1} parent=5 // pred_region
        %s185 = ssub.s32 %s26, 1
        %s186 = sand.u32 %s53, 1
        %s187 = scalar_lea.sflag [#allocation6], %s186
        %s188 = sand.u32 %s53, 1
        %s189 = smul.addr %s188, 8
        %s190 = scalar_lea.vmem [#allocation5], %s189
        // Predicated region
        $region29: #{tpu_custom_call.1} parent=27 // pred_check
          %p191 = pneg %p66
        $region30: #{tpu_custom_call.1} parent=27 // pred_check_branch
          %193 = sbr.rel (%p191) target = $region32
        $region31: #{tpu_custom_call.1} parent=27 // pred_region
          %195 = dma.done %s187, 128
        $region32: #{tpu_custom_call.1} parent=27 // pred_fallthru
          _
        %s196 = sand.u32 %s81, 1
        %s197 = scalar_lea.sflag [#allocation9], %s196
        %s198 = sand.u32 %s81, 1
        %s199 = smul.addr %s198, 8
        %s200 = scalar_lea.vmem [#allocation8], %s199
        // Predicated region
        $region33: #{tpu_custom_call.1} parent=27 // pred_check
          %p201 = pneg %p94
        $region34: #{tpu_custom_call.1} parent=27 // pred_check_branch
          %203 = sbr.rel (%p201) target = $region36
        $region35: #{tpu_custom_call.1} parent=27 // pred_region
          %205 = dma.done %s197, 128
        $region36: #{tpu_custom_call.1} parent=27 // pred_fallthru
          _
        %s206 = sand.u32 %s53, 1
        %s207 = scalar_lea.sflag [#allocation6], %s206
        %s208 = sand.u32 %s53, 1
        %s209 = smul.addr %s208, 8
        %s210 = scalar_lea.vmem [#allocation5], %s209
        %p211 = pneg %p66
        %p212 = pneg %p63
        %s213 = sand.u32 %s81, 1
        %s214 = scalar_lea.sflag [#allocation9], %s213
        %s215 = sand.u32 %s81, 1
        %s216 = smul.addr %s215, 8
        %s217 = scalar_lea.vmem [#allocation8], %s216
        %p218 = pneg %p94
        %p219 = pneg %p91
        %p220 = pneg %p120
        %p221 = pneg %p117
        %s222 = sand.u32 %s107, 1
        %s223 = scalar_lea.sflag [#allocation7], %s222
        %s224 = sand.u32 %s107, 1
        %s225 = smul.addr %s224, 2
        %s226 = scalar_lea.vmem [#allocation10], %s225
        %p227 = scmp.eq.s32.totalorder %s36, 0
        // Predicated region
        $region37: #{tpu_custom_call.1} parent=27 // pred_check
          %p228 = pneg %p227
        $region38: #{tpu_custom_call.1} parent=27 // pred_check_branch
          %230 = sbr.rel (%p228) target = $region40
        $region39: #{tpu_custom_call.1} parent=27 // pred_region
          %231 = vst [vmem:[#allocation2] sm:$0xff] 0.0
          %232 = vst [vmem:[#allocation2 + $0x8] sm:$0xff] 0.0
        $region40: #{tpu_custom_call.1} parent=27 // pred_fallthru
          _
        %s233 = sld [smem:[#allocation4 + %s35]]
        %s234 = smul.u32 %s233, 32
        %s235 = smul.u32 %s36, 8
        %s236 = smul.u32 %s36, 1024
        %p237 = scmp.lt.s32.totalorder %s236, %s234
        // Predicated region
        $region41: #{tpu_custom_call.1} parent=27 // pred_check
          %p238 = pneg %p237
        $region42: #{tpu_custom_call.1} parent=27 // pred_check_branch
          %240 = sbr.rel (%p238) target = $region44
        $region43: #{tpu_custom_call.1} parent=27 // pred_region
          %v241 = vlaneseq
          %v242 = vshrl.u32 %v241, 7
          %v243 = vlaneseq
          %v244 = vand.u32 %v243, 127
          %v245 = vstv %s235
          %v246 = vadd.s32 %v245, %v242
          %v247 = vmul.u32 %v246, 128
          %v248 = vadd.s32 %v247, %v244
          %v249 = vstv %s234
          %vm250 = vcmp.lt.s32.totalorder %v248, %v249
          %v251 = vld [vmem:[%s190] sm:$0xff]
          %v252 = vld [vmem:[#allocation2] sm:$0xff]
          %v253 = vsel %vm250, %v251, 0.0
          %v254 = vadd.f32 %v252, %v253
          %255 = vst [vmem:[#allocation2] sm:$0xff] %v254
          %v256 = vld [vmem:[%s200] sm:$0xff]
          %s257 = scalar_lea.vmem [#allocation2], 8
          %v258 = vld [vmem:[%s257] sm:$0xff]
          %v259 = vsel %vm250, %v256, 0.0
          %v260 = vadd.f32 %v258, %v259
          %261 = vst [vmem:[%s257] sm:$0xff] %v260
        $region44: #{tpu_custom_call.1} parent=27 // pred_fallthru
          _
        // Predicated region
        $region45: #{tpu_custom_call.1} parent=27 // pred_check
          %p262 = pneg %p227
        $region46: #{tpu_custom_call.1} parent=27 // pred_check_branch
          %264 = sbr.rel (%p262) target = $region48
        $region47: #{tpu_custom_call.1} parent=27 // pred_region
          %v265 = vld [vmem:[#allocation2] sm:$0xff]
          %v266 = vld [vmem:[#allocation2 + $0x8] sm:$0xff]
          %v267 = vrot.slane %v265, 4
          %v268 = vadd.f32 %v265, %v267
          %v269 = vrot.slane %v268, 2
          %v270 = vadd.f32 %v268, %v269
          %v271 = vrot.slane %v270, 1
          %v272 = vadd.f32 %v270, %v271
          %v273 = vrot.slane %v266, 4
          %v274 = vadd.f32 %v266, %v273
          %v275 = vrot.slane %v274, 2
          %v276 = vadd.f32 %v274, %v275
          %v277 = vrot.slane %v276, 1
          %v278 = vadd.f32 %v276, %v277
          %vm281 = vcmask 1041409
          %v282 = vsel %vm281, %v278, %v272
          %284 = vst [vmem:[%s226] sm:$0x3] %v282
        $region48: #{tpu_custom_call.1} parent=27 // pred_fallthru
          _
        %s285 = sand.u32 %s107, 1
        %s286 = scalar_lea.sflag [#allocation7], %s285
        %s287 = sand.u32 %s107, 1
        %s288 = smul.addr %s287, 2
        %s289 = scalar_lea.vmem [#allocation10], %s288
        // Predicated region
        $region49: #{tpu_custom_call.1} parent=27 // pred_check
          %p290 = pneg %p117
        $region50: #{tpu_custom_call.1} parent=27 // pred_check_branch
          %292 = sbr.rel (%p290) target = $region52
        $region51: #{tpu_custom_call.1} parent=27 // pred_region
          %294 = vsyncadd %s286, 0
          %s295 = smul.addr %s35, 2
          %s296 = scalar_lea.hbm %s3, %s295
          %s298 = sshll.u32 %s289, 4
          %s299 = int_to_ptr.vmem [resolvable:$true] %s298
          %s300 = sshll.u32 %s296, 4
          %s301 = int_to_ptr.hbm [resolvable:$true] %s300
          %303 = dma.vmem_to_hbm [thread:$0]  %s299, 32, %s301, %s286
        $region52: #{tpu_custom_call.1} parent=27 // pred_fallthru
          _
      $region28: #{tpu_custom_call.1} parent=5 // pred_fallthru
        _
      %p304 = scmp.le.s32.totalorder 2, %s26
      // Predicated region
      $region53: #{tpu_custom_call.1} parent=5 // pred_check
        %p305 = pneg %p304
      $region54: #{tpu_custom_call.1} parent=5 // pred_check_branch
        %307 = sbr.rel (%p305) target = $region56
      $region55: #{tpu_custom_call.1} parent=5 // pred_region
        %s308 = ssub.s32 %s26, 2
        // Predicated region
        $region57: #{tpu_custom_call.1} parent=55 // pred_check
          %p309 = pneg %p123
        $region58: #{tpu_custom_call.1} parent=55 // pred_check_branch
          %311 = sbr.rel (%p309) target = $region60
        $region59: #{tpu_custom_call.1} parent=55 // pred_region
          %s312 = sand.u32 %s108, 1
          %s313 = scalar_lea.sflag [#allocation7], %s312
          %s314 = sand.u32 %s108, 1
          %s315 = smul.addr %s314, 2
          %s316 = scalar_lea.vmem [#allocation10], %s315
          %318 = dma.done %s313, 32
        $region60: #{tpu_custom_call.1} parent=55 // pred_fallthru
          _
      $region56: #{tpu_custom_call.1} parent=5 // pred_fallthru
        _
    $region6: #{tpu_custom_call.1} parent=1 // loop_footer
      %s30 = sadd.s32 1, %s26
    $region7: #{tpu_custom_call.1} parent=1 // loop_footer_branch
      %25 = sbr.rel target = $region3
    $region8: #{tpu_custom_call.1} parent=1 // loop_exit
      _
    %319 = vsyncpa [#allocation6], 1
    %s320 = scalar_lea.sflag [#allocation6], 1
    %321 = vsyncpa %s320, 1
    %322 = vsyncpa [#allocation9], 1
    %s323 = scalar_lea.sflag [#allocation9], 1
    %324 = vsyncpa %s323, 1
    %325 = vsyncpa [#allocation7], 1
    %s326 = scalar_lea.sflag [#allocation7], 1
    %327 = vsyncpa %s326, 1

</llo_original>
